<compile_context>
chip_gen: v7x
topology: tpu7x:2x2x1
jax: 0.10.0
libtpu: 0.0.40
codegen_flags: <defaults>
</compile_context>

<pallas_src>
import jax
import jax.numpy as jnp
from jax import lax
from jax.experimental import pallas as pl
from jax.experimental.pallas import tpu as pltpu


def gru_recurrence_kernel(gi_ref, h0_ref, whh_ref, bhh_ref, out_ref, hfin_ref):
    """Single-invocation GRU recurrence over the full sequence.

    gi_ref  : (T, B, 3H)  precomputed x @ W_ih^T + b_ih, time-major, gates [r,z,n]
    h0_ref  : (B, H)      initial hidden
    whh_ref : (H, 3H)     W_hh^T
    bhh_ref : (1, 3H)     b_hh
    out_ref : (T, B, H)   relu(h_t) per step
    hfin_ref: (B, H)      final hidden (pre-relu)
    """
    T = gi_ref.shape[0]
    H = h0_ref.shape[-1]

    # Loop-invariant operands: load once, hoisted out of the time loop.
    whh = whh_ref[...].astype(jnp.float32)
    bhh = bhh_ref[...].astype(jnp.float32)
    h0 = h0_ref[...].astype(jnp.float32)

    def step(t, h_prev):
        gi = gi_ref[t].astype(jnp.float32)                       # (B, 3H)
        # The only matmul left on the serial path: (B,H) x (H,3H).
        gh = jnp.dot(h_prev, whh, preferred_element_type=jnp.float32) + bhh

        i_r, i_z, i_n = gi[:, :H], gi[:, H:2 * H], gi[:, 2 * H:]
        h_r, h_z, h_n = gh[:, :H], gh[:, H:2 * H], gh[:, 2 * H:]

        r = jax.nn.sigmoid(i_r + h_r)
        z = jax.nn.sigmoid(i_z + h_z)
        n = jnp.tanh(i_n + r * h_n)
        h_new = (1.0 - z) * n + z * h_prev

        out_ref[t] = jnp.maximum(h_new, 0.0).astype(out_ref.dtype)  # torch.relu
        return h_new

    h_fin = lax.fori_loop(0, T, step, h0, unroll=True)
    hfin_ref[...] = h_fin.astype(hfin_ref.dtype)                 # hidden (no relu)


def encoder_rnn_forward(x, hidden, params):
    """Matches EncoderRNN.forward(input, hidden).

    x:      (B, T, input_size)  (batch_first, like the PyTorch module)
    hidden: (1, B, hidden_size)
    returns (output, hidden): output (B, T, H) after relu, hidden (1, B, H)
    """
    B, T, D = x.shape
    H = hidden.shape[-1]

    # input.view(-1, input.shape[1], self.input_size) is an identity reshape here.
    x = x.reshape(-1, x.shape[1], D)

    # Hoist the input projection out of the recurrence: one big (B*T, D)x(D, 3H)
    # matmul done by XLA, produced directly in time-major layout so the kernel
    # slices one (B, 3H) block per step with no transpose anywhere.
    gi_tm = (
        jnp.einsum("btd,gd->tbg", x, params["w_ih"],
                   preferred_element_type=jnp.float32)
        + params["b_ih"]
    ).astype(jnp.float32)                                        # (T, B, 3H)

    whh_t = params["w_hh"].T.astype(jnp.float32)                 # (H, 3H)
    bhh = params["b_hh"][None, :].astype(jnp.float32)            # (1, 3H)
    h0 = hidden[0]                                               # (B, H)

    vmem = pl.BlockSpec(memory_space=pltpu.MemorySpace.VMEM)

    out_tm, h_fin = pl.pallas_call(
        gru_recurrence_kernel,
        out_shape=(
            jax.ShapeDtypeStruct((T, B, H), x.dtype),
            jax.ShapeDtypeStruct((B, H), x.dtype),
        ),
        in_specs=[vmem, vmem, vmem, vmem],
        out_specs=(vmem, vmem),
    )(gi_tm, h0, whh_t, bhh)

    output = jnp.transpose(out_tm, (1, 0, 2))    # back to batch_first (B, T, H)
    return output, h_fin[None]                   # hidden: (1, B, H)


def gru_reference(x, hidden, params):
    """Pure-JAX reference (PyTorch GRU semantics) for correctness check."""
    w_ih, w_hh = params["w_ih"], params["w_hh"]
    b_ih, b_hh = params["b_ih"], params["b_hh"]

    def step(h, x_t):
        gi = x_t @ w_ih.T + b_ih
        gh = h @ w_hh.T + b_hh
        i_r, i_z, i_n = jnp.split(gi, 3, axis=-1)
        h_r, h_z, h_n = jnp.split(gh, 3, axis=-1)
        r = jax.nn.sigmoid(i_r + h_r)
        z = jax.nn.sigmoid(i_z + h_z)
        n = jnp.tanh(i_n + r * h_n)
        h_new = (1.0 - z) * n + z * h
        return h_new, h_new

    h_fin, hs = jax.lax.scan(step, hidden[0], jnp.transpose(x, (1, 0, 2)))
    out = jnp.maximum(jnp.transpose(hs, (1, 0, 2)), 0.0)
    return out, h_fin[None]


def init_params(key, input_size, hidden_size):
    """Deterministic synthetic parameters matching nn.GRU(input_size, hidden_size)."""
    k0, k1, k2, k3, k4, k5 = jax.random.split(key, 6)
    s = 1.0 / jnp.sqrt(hidden_size)
    params = {
        # GRU weights (gate order r,z,n as in PyTorch)
        "w_ih": jax.random.uniform(k0, (3 * hidden_size, input_size), jnp.float32, -s, s),
        "w_hh": jax.random.uniform(k1, (3 * hidden_size, hidden_size), jnp.float32, -s, s),
        "b_ih": jax.random.uniform(k2, (3 * hidden_size,), jnp.float32, -s, s),
        "b_hh": jax.random.uniform(k3, (3 * hidden_size,), jnp.float32, -s, s),
        # self.embedding = nn.Linear(input_size, hidden_size) is defined but
        # never used in forward(); initialized here only for shape fidelity.
        "emb_w": jax.random.uniform(k4, (hidden_size, input_size), jnp.float32, -s, s),
        "emb_b": jax.random.uniform(k5, (hidden_size,), jnp.float32, -s, s),
    }
    return params


if __name__ == "__main__":
    INPUT_SIZE = 16
    HIDDEN_SIZE = 32
    BATCH = 4        # B*H = 128 -> lane-dense hidden slab
    SEQ = 8

    key = jax.random.PRNGKey(0)
    kx, kp = jax.random.split(key)

    x = jax.random.normal(kx, (BATCH, SEQ, INPUT_SIZE), jnp.float32)
    hidden0 = jnp.zeros((1, BATCH, HIDDEN_SIZE), jnp.float32)   # initHidden(batch_size)
    params = init_params(kp, INPUT_SIZE, HIDDEN_SIZE)

    out, h_fin = encoder_rnn_forward(x, hidden0, params)
    out = jax.block_until_ready(out)
    h_fin = jax.block_until_ready(h_fin)

    out_ref, h_ref = gru_reference(x, hidden0, params)

    assert out.shape == (BATCH, SEQ, HIDDEN_SIZE)
    assert h_fin.shape == (1, BATCH, HIDDEN_SIZE)
    assert jnp.allclose(out, out_ref, atol=1e-5, rtol=1e-5)
    assert jnp.allclose(h_fin, h_ref, atol=1e-5, rtol=1e-5)

    print("KERNEL_OK")
</pallas_src>

<mosaic_0001>
module attributes {stable_mosaic.version = 11 : i64} {
  func.func @gru_recurrence_kernel(%arg0: memref<8x4x96xf32, #tpu.memory_space<vmem>>, %arg1: memref<4x32xf32, #tpu.memory_space<vmem>>, %arg2: memref<32x96xf32, #tpu.memory_space<vmem>>, %arg3: memref<1x96xf32, #tpu.memory_space<vmem>>, %arg4: memref<8x4x32xf32, #tpu.memory_space<vmem>>, %arg5: memref<4x32xf32, #tpu.memory_space<vmem>>) attributes {dimension_semantics = [], scalar_prefetch = 0 : i64, scratch_operands = 0 : i64, tpu.core_type = #tpu.core_type<tc>} {
    %c0 = arith.constant 0 : index
    %c0_0 = arith.constant 0 : index
    %0 = vector.load %arg2[%c0, %c0_0] : memref<32x96xf32, #tpu.memory_space<vmem>>, vector<32x96xf32>
    %c0_1 = arith.constant 0 : index
    %c0_2 = arith.constant 0 : index
    %1 = vector.load %arg3[%c0_1, %c0_2] : memref<1x96xf32, #tpu.memory_space<vmem>>, vector<1x96xf32>
    %c0_3 = arith.constant 0 : index
    %c0_4 = arith.constant 0 : index
    %2 = vector.load %arg1[%c0_3, %c0_4] : memref<4x32xf32, #tpu.memory_space<vmem>>, vector<4x32xf32>
    %c0_i32 = arith.constant 0 : i32
    %3 = arith.index_cast %c0_i32 : i32 to index
    %c0_5 = arith.constant 0 : index
    %c0_6 = arith.constant 0 : index
    %4 = vector.load %arg0[%3, %c0_5, %c0_6] : memref<8x4x96xf32, #tpu.memory_space<vmem>>, vector<1x4x96xf32>
    %5 = vector.shape_cast %4 : vector<1x4x96xf32> to vector<4x96xf32>
    %cst = arith.constant dense<0.000000e+00> : vector<4x96xf32>
    %6 = tpu.matmul %2, %0, %cst {dimension_numbers = #tpu.dot_dimension_numbers<[1], [0], [0], [1], [0, 0, 1, 1], [], []>} : vector<4x32xf32>, vector<32x96xf32>, vector<4x96xf32> -> vector<4x96xf32>
    %7 = vector.broadcast %1 : vector<1x96xf32> to vector<4x96xf32>
    %8 = arith.addf %6, %7 : vector<4x96xf32>
    %9 = vector.extract_strided_slice %5 {offsets = [0, 0], sizes = [4, 32], strides = [1, 1]} : vector<4x96xf32> to vector<4x32xf32>
    %10 = vector.extract_strided_slice %5 {offsets = [0, 32], sizes = [4, 32], strides = [1, 1]} : vector<4x96xf32> to vector<4x32xf32>
    %11 = vector.extract_strided_slice %5 {offsets = [0, 64], sizes = [4, 32], strides = [1, 1]} : vector<4x96xf32> to vector<4x32xf32>
    %12 = vector.extract_strided_slice %8 {offsets = [0, 0], sizes = [4, 32], strides = [1, 1]} : vector<4x96xf32> to vector<4x32xf32>
    %13 = vector.extract_strided_slice %8 {offsets = [0, 32], sizes = [4, 32], strides = [1, 1]} : vector<4x96xf32> to vector<4x32xf32>
    %14 = vector.extract_strided_slice %8 {offsets = [0, 64], sizes = [4, 32], strides = [1, 1]} : vector<4x96xf32> to vector<4x32xf32>
    %15 = arith.addf %9, %12 : vector<4x32xf32>
    %16 = arith.negf %15 : vector<4x32xf32>
    %17 = math.exp %16 : vector<4x32xf32>
    %cst_7 = arith.constant 1.000000e+00 : f32
    %18 = vector.broadcast %cst_7 : f32 to vector<4x32xf32>
    %19 = arith.addf %18, %17 : vector<4x32xf32>
    %20 = arith.divf %18, %19 : vector<4x32xf32>
    %21 = arith.addf %10, %13 : vector<4x32xf32>
    %22 = arith.negf %21 : vector<4x32xf32>
    %23 = math.exp %22 : vector<4x32xf32>
    %cst_8 = arith.constant 1.000000e+00 : f32
    %24 = vector.broadcast %cst_8 : f32 to vector<4x32xf32>
    %25 = arith.addf %24, %23 : vector<4x32xf32>
    %26 = arith.divf %24, %25 : vector<4x32xf32>
    %27 = arith.mulf %20, %14 : vector<4x32xf32>
    %28 = arith.addf %11, %27 : vector<4x32xf32>
    %29 = math.tanh %28 : vector<4x32xf32>
    %cst_9 = arith.constant 1.000000e+00 : f32
    %30 = vector.broadcast %cst_9 : f32 to vector<4x32xf32>
    %31 = arith.subf %30, %26 : vector<4x32xf32>
    %32 = arith.mulf %31, %29 : vector<4x32xf32>
    %33 = arith.mulf %26, %2 : vector<4x32xf32>
    %34 = arith.addf %32, %33 : vector<4x32xf32>
    %cst_10 = arith.constant 0.000000e+00 : f32
    %35 = vector.broadcast %cst_10 : f32 to vector<4x32xf32>
    %36 = arith.maximumf %34, %35 : vector<4x32xf32>
    %37 = arith.index_cast %c0_i32 : i32 to index
    %c0_11 = arith.constant 0 : index
    %c0_12 = arith.constant 0 : index
    %38 = vector.load %arg4[%37, %c0_11, %c0_12] : memref<8x4x32xf32, #tpu.memory_space<vmem>>, vector<1x4x32xf32>
    %39 = vector.shape_cast %38 : vector<1x4x32xf32> to vector<4x32xf32>
    %40 = vector.shape_cast %36 : vector<4x32xf32> to vector<1x4x32xf32>
    tpu.vector_store %arg4[%37, %c0_11, %c0_12], %40 {strides = array<i32>} : memref<8x4x32xf32, #tpu.memory_space<vmem>>, vector<1x4x32xf32>,
    %c1_i32 = arith.constant 1 : i32
    %41 = arith.index_cast %c1_i32 : i32 to index
    %c0_13 = arith.constant 0 : index
    %c0_14 = arith.constant 0 : index
    %42 = vector.load %arg0[%41, %c0_13, %c0_14] : memref<8x4x96xf32, #tpu.memory_space<vmem>>, vector<1x4x96xf32>
    %43 = vector.shape_cast %42 : vector<1x4x96xf32> to vector<4x96xf32>
    %cst_15 = arith.constant dense<0.000000e+00> : vector<4x96xf32>
    %44 = tpu.matmul %34, %0, %cst_15 {dimension_numbers = #tpu.dot_dimension_numbers<[1], [0], [0], [1], [0, 0, 1, 1], [], []>} : vector<4x32xf32>, vector<32x96xf32>, vector<4x96xf32> -> vector<4x96xf32>
    %45 = vector.broadcast %1 : vector<1x96xf32> to vector<4x96xf32>
    %46 = arith.addf %44, %45 : vector<4x96xf32>
    %47 = vector.extract_strided_slice %43 {offsets = [0, 0], sizes = [4, 32], strides = [1, 1]} : vector<4x96xf32> to vector<4x32xf32>
    %48 = vector.extract_strided_slice %43 {offsets = [0, 32], sizes = [4, 32], strides = [1, 1]} : vector<4x96xf32> to vector<4x32xf32>
    %49 = vector.extract_strided_slice %43 {offsets = [0, 64], sizes = [4, 32], strides = [1, 1]} : vector<4x96xf32> to vector<4x32xf32>
    %50 = vector.extract_strided_slice %46 {offsets = [0, 0], sizes = [4, 32], strides = [1, 1]} : vector<4x96xf32> to vector<4x32xf32>
    %51 = vector.extract_strided_slice %46 {offsets = [0, 32], sizes = [4, 32], strides = [1, 1]} : vector<4x96xf32> to vector<4x32xf32>
    %52 = vector.extract_strided_slice %46 {offsets = [0, 64], sizes = [4, 32], strides = [1, 1]} : vector<4x96xf32> to vector<4x32xf32>
    %53 = arith.addf %47, %50 : vector<4x32xf32>
    %54 = arith.negf %53 : vector<4x32xf32>
    %55 = math.exp %54 : vector<4x32xf32>
    %cst_16 = arith.constant 1.000000e+00 : f32
    %56 = vector.broadcast %cst_16 : f32 to vector<4x32xf32>
    %57 = arith.addf %56, %55 : vector<4x32xf32>
    %58 = arith.divf %56, %57 : vector<4x32xf32>
    %59 = arith.addf %48, %51 : vector<4x32xf32>
    %60 = arith.negf %59 : vector<4x32xf32>
    %61 = math.exp %60 : vector<4x32xf32>
    %cst_17 = arith.constant 1.000000e+00 : f32
    %62 = vector.broadcast %cst_17 : f32 to vector<4x32xf32>
    %63 = arith.addf %62, %61 : vector<4x32xf32>
    %64 = arith.divf %62, %63 : vector<4x32xf32>
    %65 = arith.mulf %58, %52 : vector<4x32xf32>
    %66 = arith.addf %49, %65 : vector<4x32xf32>
    %67 = math.tanh %66 : vector<4x32xf32>
    %cst_18 = arith.constant 1.000000e+00 : f32
    %68 = vector.broadcast %cst_18 : f32 to vector<4x32xf32>
    %69 = arith.subf %68, %64 : vector<4x32xf32>
    %70 = arith.mulf %69, %67 : vector<4x32xf32>
    %71 = arith.mulf %64, %34 : vector<4x32xf32>
    %72 = arith.addf %70, %71 : vector<4x32xf32>
    %cst_19 = arith.constant 0.000000e+00 : f32
    %73 = vector.broadcast %cst_19 : f32 to vector<4x32xf32>
    %74 = arith.maximumf %72, %73 : vector<4x32xf32>
    %75 = arith.index_cast %c1_i32 : i32 to index
    %c0_20 = arith.constant 0 : index
    %c0_21 = arith.constant 0 : index
    %76 = vector.load %arg4[%75, %c0_20, %c0_21] : memref<8x4x32xf32, #tpu.memory_space<vmem>>, vector<1x4x32xf32>
    %77 = vector.shape_cast %76 : vector<1x4x32xf32> to vector<4x32xf32>
    %78 = vector.shape_cast %74 : vector<4x32xf32> to vector<1x4x32xf32>
    tpu.vector_store %arg4[%75, %c0_20, %c0_21], %78 {strides = array<i32>} : memref<8x4x32xf32, #tpu.memory_space<vmem>>, vector<1x4x32xf32>,
    %c2_i32 = arith.constant 2 : i32
    %79 = arith.index_cast %c2_i32 : i32 to index
    %c0_22 = arith.constant 0 : index
    %c0_23 = arith.constant 0 : index
    %80 = vector.load %arg0[%79, %c0_22, %c0_23] : memref<8x4x96xf32, #tpu.memory_space<vmem>>, vector<1x4x96xf32>
    %81 = vector.shape_cast %80 : vector<1x4x96xf32> to vector<4x96xf32>
    %cst_24 = arith.constant dense<0.000000e+00> : vector<4x96xf32>
    %82 = tpu.matmul %72, %0, %cst_24 {dimension_numbers = #tpu.dot_dimension_numbers<[1], [0], [0], [1], [0, 0, 1, 1], [], []>} : vector<4x32xf32>, vector<32x96xf32>, vector<4x96xf32> -> vector<4x96xf32>
    %83 = vector.broadcast %1 : vector<1x96xf32> to vector<4x96xf32>
    %84 = arith.addf %82, %83 : vector<4x96xf32>
    %85 = vector.extract_strided_slice %81 {offsets = [0, 0], sizes = [4, 32], strides = [1, 1]} : vector<4x96xf32> to vector<4x32xf32>
    %86 = vector.extract_strided_slice %81 {offsets = [0, 32], sizes = [4, 32], strides = [1, 1]} : vector<4x96xf32> to vector<4x32xf32>
    %87 = vector.extract_strided_slice %81 {offsets = [0, 64], sizes = [4, 32], strides = [1, 1]} : vector<4x96xf32> to vector<4x32xf32>
    %88 = vector.extract_strided_slice %84 {offsets = [0, 0], sizes = [4, 32], strides = [1, 1]} : vector<4x96xf32> to vector<4x32xf32>
    %89 = vector.extract_strided_slice %84 {offsets = [0, 32], sizes = [4, 32], strides = [1, 1]} : vector<4x96xf32> to vector<4x32xf32>
    %90 = vector.extract_strided_slice %84 {offsets = [0, 64], sizes = [4, 32], strides = [1, 1]} : vector<4x96xf32> to vector<4x32xf32>
    %91 = arith.addf %85, %88 : vector<4x32xf32>
    %92 = arith.negf %91 : vector<4x32xf32>
    %93 = math.exp %92 : vector<4x32xf32>
    %cst_25 = arith.constant 1.000000e+00 : f32
    %94 = vector.broadcast %cst_25 : f32 to vector<4x32xf32>
    %95 = arith.addf %94, %93 : vector<4x32xf32>
    %96 = arith.divf %94, %95 : vector<4x32xf32>
    %97 = arith.addf %86, %89 : vector<4x32xf32>
    %98 = arith.negf %97 : vector<4x32xf32>
    %99 = math.exp %98 : vector<4x32xf32>
    %cst_26 = arith.constant 1.000000e+00 : f32
    %100 = vector.broadcast %cst_26 : f32 to vector<4x32xf32>
    %101 = arith.addf %100, %99 : vector<4x32xf32>
    %102 = arith.divf %100, %101 : vector<4x32xf32>
    %103 = arith.mulf %96, %90 : vector<4x32xf32>
    %104 = arith.addf %87, %103 : vector<4x32xf32>
    %105 = math.tanh %104 : vector<4x32xf32>
    %cst_27 = arith.constant 1.000000e+00 : f32
    %106 = vector.broadcast %cst_27 : f32 to vector<4x32xf32>
    %107 = arith.subf %106, %102 : vector<4x32xf32>
    %108 = arith.mulf %107, %105 : vector<4x32xf32>
    %109 = arith.mulf %102, %72 : vector<4x32xf32>
    %110 = arith.addf %108, %109 : vector<4x32xf32>
    %cst_28 = arith.constant 0.000000e+00 : f32
    %111 = vector.broadcast %cst_28 : f32 to vector<4x32xf32>
    %112 = arith.maximumf %110, %111 : vector<4x32xf32>
    %113 = arith.index_cast %c2_i32 : i32 to index
    %c0_29 = arith.constant 0 : index
    %c0_30 = arith.constant 0 : index
    %114 = vector.load %arg4[%113, %c0_29, %c0_30] : memref<8x4x32xf32, #tpu.memory_space<vmem>>, vector<1x4x32xf32>
    %115 = vector.shape_cast %114 : vector<1x4x32xf32> to vector<4x32xf32>
    %116 = vector.shape_cast %112 : vector<4x32xf32> to vector<1x4x32xf32>
    tpu.vector_store %arg4[%113, %c0_29, %c0_30], %116 {strides = array<i32>} : memref<8x4x32xf32, #tpu.memory_space<vmem>>, vector<1x4x32xf32>,
    %c3_i32 = arith.constant 3 : i32
    %117 = arith.index_cast %c3_i32 : i32 to index
    %c0_31 = arith.constant 0 : index
    %c0_32 = arith.constant 0 : index
    %118 = vector.load %arg0[%117, %c0_31, %c0_32] : memref<8x4x96xf32, #tpu.memory_space<vmem>>, vector<1x4x96xf32>
    %119 = vector.shape_cast %118 : vector<1x4x96xf32> to vector<4x96xf32>
    %cst_33 = arith.constant dense<0.000000e+00> : vector<4x96xf32>
    %120 = tpu.matmul %110, %0, %cst_33 {dimension_numbers = #tpu.dot_dimension_numbers<[1], [0], [0], [1], [0, 0, 1, 1], [], []>} : vector<4x32xf32>, vector<32x96xf32>, vector<4x96xf32> -> vector<4x96xf32>
    %121 = vector.broadcast %1 : vector<1x96xf32> to vector<4x96xf32>
    %122 = arith.addf %120, %121 : vector<4x96xf32>
    %123 = vector.extract_strided_slice %119 {offsets = [0, 0], sizes = [4, 32], strides = [1, 1]} : vector<4x96xf32> to vector<4x32xf32>
    %124 = vector.extract_strided_slice %119 {offsets = [0, 32], sizes = [4, 32], strides = [1, 1]} : vector<4x96xf32> to vector<4x32xf32>
    %125 = vector.extract_strided_slice %119 {offsets = [0, 64], sizes = [4, 32], strides = [1, 1]} : vector<4x96xf32> to vector<4x32xf32>
    %126 = vector.extract_strided_slice %122 {offsets = [0, 0], sizes = [4, 32], strides = [1, 1]} : vector<4x96xf32> to vector<4x32xf32>
    %127 = vector.extract_strided_slice %122 {offsets = [0, 32], sizes = [4, 32], strides = [1, 1]} : vector<4x96xf32> to vector<4x32xf32>
    %128 = vector.extract_strided_slice %122 {offsets = [0, 64], sizes = [4, 32], strides = [1, 1]} : vector<4x96xf32> to vector<4x32xf32>
    %129 = arith.addf %123, %126 : vector<4x32xf32>
    %130 = arith.negf %129 : vector<4x32xf32>
    %131 = math.exp %130 : vector<4x32xf32>
    %cst_34 = arith.constant 1.000000e+00 : f32
    %132 = vector.broadcast %cst_34 : f32 to vector<4x32xf32>
    %133 = arith.addf %132, %131 : vector<4x32xf32>
    %134 = arith.divf %132, %133 : vector<4x32xf32>
    %135 = arith.addf %124, %127 : vector<4x32xf32>
    %136 = arith.negf %135 : vector<4x32xf32>
    %137 = math.exp %136 : vector<4x32xf32>
    %cst_35 = arith.constant 1.000000e+00 : f32
    %138 = vector.broadcast %cst_35 : f32 to vector<4x32xf32>
    %139 = arith.addf %138, %137 : vector<4x32xf32>
    %140 = arith.divf %138, %139 : vector<4x32xf32>
    %141 = arith.mulf %134, %128 : vector<4x32xf32>
    %142 = arith.addf %125, %141 : vector<4x32xf32>
    %143 = math.tanh %142 : vector<4x32xf32>
    %cst_36 = arith.constant 1.000000e+00 : f32
    %144 = vector.broadcast %cst_36 : f32 to vector<4x32xf32>
    %145 = arith.subf %144, %140 : vector<4x32xf32>
    %146 = arith.mulf %145, %143 : vector<4x32xf32>
    %147 = arith.mulf %140, %110 : vector<4x32xf32>
    %148 = arith.addf %146, %147 : vector<4x32xf32>
    %cst_37 = arith.constant 0.000000e+00 : f32
    %149 = vector.broadcast %cst_37 : f32 to vector<4x32xf32>
    %150 = arith.maximumf %148, %149 : vector<4x32xf32>
    %151 = arith.index_cast %c3_i32 : i32 to index
    %c0_38 = arith.constant 0 : index
    %c0_39 = arith.constant 0 : index
    %152 = vector.load %arg4[%151, %c0_38, %c0_39] : memref<8x4x32xf32, #tpu.memory_space<vmem>>, vector<1x4x32xf32>
    %153 = vector.shape_cast %152 : vector<1x4x32xf32> to vector<4x32xf32>
    %154 = vector.shape_cast %150 : vector<4x32xf32> to vector<1x4x32xf32>
    tpu.vector_store %arg4[%151, %c0_38, %c0_39], %154 {strides = array<i32>} : memref<8x4x32xf32, #tpu.memory_space<vmem>>, vector<1x4x32xf32>,
    %c4_i32 = arith.constant 4 : i32
    %155 = arith.index_cast %c4_i32 : i32 to index
    %c0_40 = arith.constant 0 : index
    %c0_41 = arith.constant 0 : index
    %156 = vector.load %arg0[%155, %c0_40, %c0_41] : memref<8x4x96xf32, #tpu.memory_space<vmem>>, vector<1x4x96xf32>
    %157 = vector.shape_cast %156 : vector<1x4x96xf32> to vector<4x96xf32>
    %cst_42 = arith.constant dense<0.000000e+00> : vector<4x96xf32>
    %158 = tpu.matmul %148, %0, %cst_42 {dimension_numbers = #tpu.dot_dimension_numbers<[1], [0], [0], [1], [0, 0, 1, 1], [], []>} : vector<4x32xf32>, vector<32x96xf32>, vector<4x96xf32> -> vector<4x96xf32>
    %159 = vector.broadcast %1 : vector<1x96xf32> to vector<4x96xf32>
    %160 = arith.addf %158, %159 : vector<4x96xf32>
    %161 = vector.extract_strided_slice %157 {offsets = [0, 0], sizes = [4, 32], strides = [1, 1]} : vector<4x96xf32> to vector<4x32xf32>
    %162 = vector.extract_strided_slice %157 {offsets = [0, 32], sizes = [4, 32], strides = [1, 1]} : vector<4x96xf32> to vector<4x32xf32>
    %163 = vector.extract_strided_slice %157 {offsets = [0, 64], sizes = [4, 32], strides = [1, 1]} : vector<4x96xf32> to vector<4x32xf32>
    %164 = vector.extract_strided_slice %160 {offsets = [0, 0], sizes = [4, 32], strides = [1, 1]} : vector<4x96xf32> to vector<4x32xf32>
    %165 = vector.extract_strided_slice %160 {offsets = [0, 32], sizes = [4, 32], strides = [1, 1]} : vector<4x96xf32> to vector<4x32xf32>
    %166 = vector.extract_strided_slice %160 {offsets = [0, 64], sizes = [4, 32], strides = [1, 1]} : vector<4x96xf32> to vector<4x32xf32>
    %167 = arith.addf %161, %164 : vector<4x32xf32>
    %168 = arith.negf %167 : vector<4x32xf32>
    %169 = math.exp %168 : vector<4x32xf32>
    %cst_43 = arith.constant 1.000000e+00 : f32
    %170 = vector.broadcast %cst_43 : f32 to vector<4x32xf32>
    %171 = arith.addf %170, %169 : vector<4x32xf32>
    %172 = arith.divf %170, %171 : vector<4x32xf32>
    %173 = arith.addf %162, %165 : vector<4x32xf32>
    %174 = arith.negf %173 : vector<4x32xf32>
    %175 = math.exp %174 : vector<4x32xf32>
    %cst_44 = arith.constant 1.000000e+00 : f32
    %176 = vector.broadcast %cst_44 : f32 to vector<4x32xf32>
    %177 = arith.addf %176, %175 : vector<4x32xf32>
    %178 = arith.divf %176, %177 : vector<4x32xf32>
    %179 = arith.mulf %172, %166 : vector<4x32xf32>
    %180 = arith.addf %163, %179 : vector<4x32xf32>
    %181 = math.tanh %180 : vector<4x32xf32>
    %cst_45 = arith.constant 1.000000e+00 : f32
    %182 = vector.broadcast %cst_45 : f32 to vector<4x32xf32>
    %183 = arith.subf %182, %178 : vector<4x32xf32>
    %184 = arith.mulf %183, %181 : vector<4x32xf32>
    %185 = arith.mulf %178, %148 : vector<4x32xf32>
    %186 = arith.addf %184, %185 : vector<4x32xf32>
    %cst_46 = arith.constant 0.000000e+00 : f32
    %187 = vector.broadcast %cst_46 : f32 to vector<4x32xf32>
    %188 = arith.maximumf %186, %187 : vector<4x32xf32>
    %189 = arith.index_cast %c4_i32 : i32 to index
    %c0_47 = arith.constant 0 : index
    %c0_48 = arith.constant 0 : index
    %190 = vector.load %arg4[%189, %c0_47, %c0_48] : memref<8x4x32xf32, #tpu.memory_space<vmem>>, vector<1x4x32xf32>
    %191 = vector.shape_cast %190 : vector<1x4x32xf32> to vector<4x32xf32>
    %192 = vector.shape_cast %188 : vector<4x32xf32> to vector<1x4x32xf32>
    tpu.vector_store %arg4[%189, %c0_47, %c0_48], %192 {strides = array<i32>} : memref<8x4x32xf32, #tpu.memory_space<vmem>>, vector<1x4x32xf32>,
    %c5_i32 = arith.constant 5 : i32
    %193 = arith.index_cast %c5_i32 : i32 to index
    %c0_49 = arith.constant 0 : index
    %c0_50 = arith.constant 0 : index
    %194 = vector.load %arg0[%193, %c0_49, %c0_50] : memref<8x4x96xf32, #tpu.memory_space<vmem>>, vector<1x4x96xf32>
    %195 = vector.shape_cast %194 : vector<1x4x96xf32> to vector<4x96xf32>
    %cst_51 = arith.constant dense<0.000000e+00> : vector<4x96xf32>
    %196 = tpu.matmul %186, %0, %cst_51 {dimension_numbers = #tpu.dot_dimension_numbers<[1], [0], [0], [1], [0, 0, 1, 1], [], []>} : vector<4x32xf32>, vector<32x96xf32>, vector<4x96xf32> -> vector<4x96xf32>
    %197 = vector.broadcast %1 : vector<1x96xf32> to vector<4x96xf32>
    %198 = arith.addf %196, %197 : vector<4x96xf32>
    %199 = vector.extract_strided_slice %195 {offsets = [0, 0], sizes = [4, 32], strides = [1, 1]} : vector<4x96xf32> to vector<4x32xf32>
    %200 = vector.extract_strided_slice %195 {offsets = [0, 32], sizes = [4, 32], strides = [1, 1]} : vector<4x96xf32> to vector<4x32xf32>
    %201 = vector.extract_strided_slice %195 {offsets = [0, 64], sizes = [4, 32], strides = [1, 1]} : vector<4x96xf32> to vector<4x32xf32>
    %202 = vector.extract_strided_slice %198 {offsets = [0, 0], sizes = [4, 32], strides = [1, 1]} : vector<4x96xf32> to vector<4x32xf32>
    %203 = vector.extract_strided_slice %198 {offsets = [0, 32], sizes = [4, 32], strides = [1, 1]} : vector<4x96xf32> to vector<4x32xf32>
    %204 = vector.extract_strided_slice %198 {offsets = [0, 64], sizes = [4, 32], strides = [1, 1]} : vector<4x96xf32> to vector<4x32xf32>
    %205 = arith.addf %199, %202 : vector<4x32xf32>
    %206 = arith.negf %205 : vector<4x32xf32>
    %207 = math.exp %206 : vector<4x32xf32>
    %cst_52 = arith.constant 1.000000e+00 : f32
    %208 = vector.broadcast %cst_52 : f32 to vector<4x32xf32>
    %209 = arith.addf %208, %207 : vector<4x32xf32>
    %210 = arith.divf %208, %209 : vector<4x32xf32>
    %211 = arith.addf %200, %203 : vector<4x32xf32>
    %212 = arith.negf %211 : vector<4x32xf32>
    %213 = math.exp %212 : vector<4x32xf32>
    %cst_53 = arith.constant 1.000000e+00 : f32
    %214 = vector.broadcast %cst_53 : f32 to vector<4x32xf32>
    %215 = arith.addf %214, %213 : vector<4x32xf32>
    %216 = arith.divf %214, %215 : vector<4x32xf32>
    %217 = arith.mulf %210, %204 : vector<4x32xf32>
    %218 = arith.addf %201, %217 : vector<4x32xf32>
    %219 = math.tanh %218 : vector<4x32xf32>
    %cst_54 = arith.constant 1.000000e+00 : f32
    %220 = vector.broadcast %cst_54 : f32 to vector<4x32xf32>
    %221 = arith.subf %220, %216 : vector<4x32xf32>
    %222 = arith.mulf %221, %219 : vector<4x32xf32>
    %223 = arith.mulf %216, %186 : vector<4x32xf32>
    %224 = arith.addf %222, %223 : vector<4x32xf32>
    %cst_55 = arith.constant 0.000000e+00 : f32
    %225 = vector.broadcast %cst_55 : f32 to vector<4x32xf32>
    %226 = arith.maximumf %224, %225 : vector<4x32xf32>
    %227 = arith.index_cast %c5_i32 : i32 to index
    %c0_56 = arith.constant 0 : index
    %c0_57 = arith.constant 0 : index
    %228 = vector.load %arg4[%227, %c0_56, %c0_57] : memref<8x4x32xf32, #tpu.memory_space<vmem>>, vector<1x4x32xf32>
    %229 = vector.shape_cast %228 : vector<1x4x32xf32> to vector<4x32xf32>
    %230 = vector.shape_cast %226 : vector<4x32xf32> to vector<1x4x32xf32>
    tpu.vector_store %arg4[%227, %c0_56, %c0_57], %230 {strides = array<i32>} : memref<8x4x32xf32, #tpu.memory_space<vmem>>, vector<1x4x32xf32>,
    %c6_i32 = arith.constant 6 : i32
    %231 = arith.index_cast %c6_i32 : i32 to index
    %c0_58 = arith.constant 0 : index
    %c0_59 = arith.constant 0 : index
    %232 = vector.load %arg0[%231, %c0_58, %c0_59] : memref<8x4x96xf32, #tpu.memory_space<vmem>>, vector<1x4x96xf32>
    %233 = vector.shape_cast %232 : vector<1x4x96xf32> to vector<4x96xf32>
    %cst_60 = arith.constant dense<0.000000e+00> : vector<4x96xf32>
    %234 = tpu.matmul %224, %0, %cst_60 {dimension_numbers = #tpu.dot_dimension_numbers<[1], [0], [0], [1], [0, 0, 1, 1], [], []>} : vector<4x32xf32>, vector<32x96xf32>, vector<4x96xf32> -> vector<4x96xf32>
    %235 = vector.broadcast %1 : vector<1x96xf32> to vector<4x96xf32>
    %236 = arith.addf %234, %235 : vector<4x96xf32>
    %237 = vector.extract_strided_slice %233 {offsets = [0, 0], sizes = [4, 32], strides = [1, 1]} : vector<4x96xf32> to vector<4x32xf32>
    %238 = vector.extract_strided_slice %233 {offsets = [0, 32], sizes = [4, 32], strides = [1, 1]} : vector<4x96xf32> to vector<4x32xf32>
    %239 = vector.extract_strided_slice %233 {offsets = [0, 64], sizes = [4, 32], strides = [1, 1]} : vector<4x96xf32> to vector<4x32xf32>
    %240 = vector.extract_strided_slice %236 {offsets = [0, 0], sizes = [4, 32], strides = [1, 1]} : vector<4x96xf32> to vector<4x32xf32>
    %241 = vector.extract_strided_slice %236 {offsets = [0, 32], sizes = [4, 32], strides = [1, 1]} : vector<4x96xf32> to vector<4x32xf32>
    %242 = vector.extract_strided_slice %236 {offsets = [0, 64], sizes = [4, 32], strides = [1, 1]} : vector<4x96xf32> to vector<4x32xf32>
    %243 = arith.addf %237, %240 : vector<4x32xf32>
    %244 = arith.negf %243 : vector<4x32xf32>
    %245 = math.exp %244 : vector<4x32xf32>
    %cst_61 = arith.constant 1.000000e+00 : f32
    %246 = vector.broadcast %cst_61 : f32 to vector<4x32xf32>
    %247 = arith.addf %246, %245 : vector<4x32xf32>
    %248 = arith.divf %246, %247 : vector<4x32xf32>
    %249 = arith.addf %238, %241 : vector<4x32xf32>
    %250 = arith.negf %249 : vector<4x32xf32>
    %251 = math.exp %250 : vector<4x32xf32>
    %cst_62 = arith.constant 1.000000e+00 : f32
    %252 = vector.broadcast %cst_62 : f32 to vector<4x32xf32>
    %253 = arith.addf %252, %251 : vector<4x32xf32>
    %254 = arith.divf %252, %253 : vector<4x32xf32>
    %255 = arith.mulf %248, %242 : vector<4x32xf32>
    %256 = arith.addf %239, %255 : vector<4x32xf32>
    %257 = math.tanh %256 : vector<4x32xf32>
    %cst_63 = arith.constant 1.000000e+00 : f32
    %258 = vector.broadcast %cst_63 : f32 to vector<4x32xf32>
    %259 = arith.subf %258, %254 : vector<4x32xf32>
    %260 = arith.mulf %259, %257 : vector<4x32xf32>
    %261 = arith.mulf %254, %224 : vector<4x32xf32>
    %262 = arith.addf %260, %261 : vector<4x32xf32>
    %cst_64 = arith.constant 0.000000e+00 : f32
    %263 = vector.broadcast %cst_64 : f32 to vector<4x32xf32>
    %264 = arith.maximumf %262, %263 : vector<4x32xf32>
    %265 = arith.index_cast %c6_i32 : i32 to index
    %c0_65 = arith.constant 0 : index
    %c0_66 = arith.constant 0 : index
    %266 = vector.load %arg4[%265, %c0_65, %c0_66] : memref<8x4x32xf32, #tpu.memory_space<vmem>>, vector<1x4x32xf32>
    %267 = vector.shape_cast %266 : vector<1x4x32xf32> to vector<4x32xf32>
    %268 = vector.shape_cast %264 : vector<4x32xf32> to vector<1x4x32xf32>
    tpu.vector_store %arg4[%265, %c0_65, %c0_66], %268 {strides = array<i32>} : memref<8x4x32xf32, #tpu.memory_space<vmem>>, vector<1x4x32xf32>,
    %c7_i32 = arith.constant 7 : i32
    %269 = arith.index_cast %c7_i32 : i32 to index
    %c0_67 = arith.constant 0 : index
    %c0_68 = arith.constant 0 : index
    %270 = vector.load %arg0[%269, %c0_67, %c0_68] : memref<8x4x96xf32, #tpu.memory_space<vmem>>, vector<1x4x96xf32>
    %271 = vector.shape_cast %270 : vector<1x4x96xf32> to vector<4x96xf32>
    %cst_69 = arith.constant dense<0.000000e+00> : vector<4x96xf32>
    %272 = tpu.matmul %262, %0, %cst_69 {dimension_numbers = #tpu.dot_dimension_numbers<[1], [0], [0], [1], [0, 0, 1, 1], [], []>} : vector<4x32xf32>, vector<32x96xf32>, vector<4x96xf32> -> vector<4x96xf32>
    %273 = vector.broadcast %1 : vector<1x96xf32> to vector<4x96xf32>
    %274 = arith.addf %272, %273 : vector<4x96xf32>
    %275 = vector.extract_strided_slice %271 {offsets = [0, 0], sizes = [4, 32], strides = [1, 1]} : vector<4x96xf32> to vector<4x32xf32>
    %276 = vector.extract_strided_slice %271 {offsets = [0, 32], sizes = [4, 32], strides = [1, 1]} : vector<4x96xf32> to vector<4x32xf32>
    %277 = vector.extract_strided_slice %271 {offsets = [0, 64], sizes = [4, 32], strides = [1, 1]} : vector<4x96xf32> to vector<4x32xf32>
    %278 = vector.extract_strided_slice %274 {offsets = [0, 0], sizes = [4, 32], strides = [1, 1]} : vector<4x96xf32> to vector<4x32xf32>
    %279 = vector.extract_strided_slice %274 {offsets = [0, 32], sizes = [4, 32], strides = [1, 1]} : vector<4x96xf32> to vector<4x32xf32>
    %280 = vector.extract_strided_slice %274 {offsets = [0, 64], sizes = [4, 32], strides = [1, 1]} : vector<4x96xf32> to vector<4x32xf32>
    %281 = arith.addf %275, %278 : vector<4x32xf32>
    %282 = arith.negf %281 : vector<4x32xf32>
    %283 = math.exp %282 : vector<4x32xf32>
    %cst_70 = arith.constant 1.000000e+00 : f32
    %284 = vector.broadcast %cst_70 : f32 to vector<4x32xf32>
    %285 = arith.addf %284, %283 : vector<4x32xf32>
    %286 = arith.divf %284, %285 : vector<4x32xf32>
    %287 = arith.addf %276, %279 : vector<4x32xf32>
    %288 = arith.negf %287 : vector<4x32xf32>
    %289 = math.exp %288 : vector<4x32xf32>
    %cst_71 = arith.constant 1.000000e+00 : f32
    %290 = vector.broadcast %cst_71 : f32 to vector<4x32xf32>
    %291 = arith.addf %290, %289 : vector<4x32xf32>
    %292 = arith.divf %290, %291 : vector<4x32xf32>
    %293 = arith.mulf %286, %280 : vector<4x32xf32>
    %294 = arith.addf %277, %293 : vector<4x32xf32>
    %295 = math.tanh %294 : vector<4x32xf32>
    %cst_72 = arith.constant 1.000000e+00 : f32
    %296 = vector.broadcast %cst_72 : f32 to vector<4x32xf32>
    %297 = arith.subf %296, %292 : vector<4x32xf32>
    %298 = arith.mulf %297, %295 : vector<4x32xf32>
    %299 = arith.mulf %292, %262 : vector<4x32xf32>
    %300 = arith.addf %298, %299 : vector<4x32xf32>
    %cst_73 = arith.constant 0.000000e+00 : f32
    %301 = vector.broadcast %cst_73 : f32 to vector<4x32xf32>
    %302 = arith.maximumf %300, %301 : vector<4x32xf32>
    %303 = arith.index_cast %c7_i32 : i32 to index
    %c0_74 = arith.constant 0 : index
    %c0_75 = arith.constant 0 : index
    %304 = vector.load %arg4[%303, %c0_74, %c0_75] : memref<8x4x32xf32, #tpu.memory_space<vmem>>, vector<1x4x32xf32>
    %305 = vector.shape_cast %304 : vector<1x4x32xf32> to vector<4x32xf32>
    %306 = vector.shape_cast %302 : vector<4x32xf32> to vector<1x4x32xf32>
    tpu.vector_store %arg4[%303, %c0_74, %c0_75], %306 {strides = array<i32>} : memref<8x4x32xf32, #tpu.memory_space<vmem>>, vector<1x4x32xf32>,
    %c8_i32 = arith.constant 8 : i32
    %c0_76 = arith.constant 0 : index
    %c0_77 = arith.constant 0 : index
    %307 = vector.load %arg5[%c0_76, %c0_77] : memref<4x32xf32, #tpu.memory_space<vmem>>, vector<4x32xf32>
    tpu.vector_store %arg5[%c0_76, %c0_77], %300 {strides = array<i32>} : memref<4x32xf32, #tpu.memory_space<vmem>>, vector<4x32xf32>,
    return
  }
}

</mosaic_0001>

<llo_original>
// kernel: tpu_custom_call.1
$region0: #{tpu_custom_call.1}
  #allocation0 [shape = 'u32[]', space=smem, size = 0x4, offset = 0x4, fixed_abs, tag = 'smem constant byte address 0x4 - core index']
  #allocation1 [shape = 'u32[144,128]{1,0:T(1,128)}', space=vmem, size = 0x12000, scoped, tag = 'internal scratch']
  %s0 = inlined_call_operand.hbm [shape: f32[8,4,96], index: 0, kind: input, shape index: {}]
  %s1 = inlined_call_operand.hbm [shape: f32[4,32], index: 1, kind: input, shape index: {}]
  %s2 = inlined_call_operand.hbm [shape: f32[32,96], index: 2, kind: input, shape index: {}]
  %s3 = inlined_call_operand.vmem [shape: f32[1,96], index: 3, kind: input, shape index: {}]
  %s4 = inlined_call_operand.hbm [shape: f32[8,4,32], index: 4, kind: output, shape index: {0}]
  %s5 = inlined_call_operand.hbm [shape: f32[4,32], index: 5, kind: output, shape index: {1}]
  %6 = xla_tuple %s4, %s5
  %s7 = sld [smem:[#allocation0]]
  $region46: #{tpu_custom_call.1} parent=0
    _
  %s9 = ssub.s32 1, %s7
  %s10 = scalar_select 0, %s9, %s7
  $region1: #{tpu_custom_call.1} parent=0
    #allocation2 [shape = 'u8[16384]{0}', space=vmem, size = 0x4000, scoped, tag = 'input window, operand 0, single buffered']
    #allocation3 [shape = 's32[1]{0}', space=sflag, size = 0x4, scoped, tag = 'scoped memory for tpu_custom_call.1']
    #allocation4 [shape = 's32[1]{0}', space=sflag, size = 0x4, scoped, tag = 'scoped memory for tpu_custom_call.1']
    #allocation5 [shape = 'u8[2048]{0}', space=vmem, size = 0x800, scoped, tag = 'input window, operand 1, single buffered']
    #allocation6 [shape = 's32[1]{0}', space=sflag, size = 0x4, scoped, tag = 'scoped memory for tpu_custom_call.1']
    #allocation7 [shape = 'u8[16384]{0}', space=vmem, size = 0x4000, scoped, tag = 'input window, operand 2, single buffered']
    #allocation8 [shape = 'u8[16384]{0}', space=vmem, size = 0x4000, scoped, tag = 'output window, operand 0, single buffered']
    #allocation9 [shape = 'u8[2048]{0}', space=vmem, size = 0x800, scoped, tag = 'output window, operand 1, single buffered']
    #allocation10 [shape = 's32[1]{0}', space=sflag, size = 0x4, scoped, tag = 'scoped memory for tpu_custom_call.1']
    %11 = vsyncpa [#allocation3], 0
    %12 = vsyncpa [#allocation6], 0
    %13 = vsyncpa [#allocation4], 0
    %14 = vsyncpa [#allocation10], 0
    // Predicated region
    $region2: #{tpu_custom_call.1} parent=1 // pred_check
      _
    $region3: #{tpu_custom_call.1} parent=1 // pred_check_branch
      %16 = sbr.rel (0) target = $region5
    $region4: #{tpu_custom_call.1} parent=1 // pred_region
      %s18 = ssub.s32 512, 512
      %19 = vsyncadd [#allocation3], %s18
      %s20 = sshll.u32 [#allocation2], 4
      %s21 = int_to_ptr.vmem [resolvable:$true] %s20
      %26 = dma.hbm_to_vmem [thread:$0]  %s0, 512, %s21, [#allocation3], 64, 64, 4
    $region5: #{tpu_custom_call.1} parent=1 // pred_fallthru
      _
    // Predicated region
    $region6: #{tpu_custom_call.1} parent=1 // pred_check
      _
    $region7: #{tpu_custom_call.1} parent=1 // pred_check_branch
      %28 = sbr.rel (0) target = $region9
    $region8: #{tpu_custom_call.1} parent=1 // pred_region
      %s30 = ssub.s32 64, 64
      %31 = vsyncadd [#allocation6], %s30
      %s33 = sshll.u32 [#allocation5], 4
      %s34 = int_to_ptr.vmem [resolvable:$true] %s33
      %36 = dma.hbm_to_vmem [thread:$0]  %s1, 64, %s34, [#allocation6]
    $region9: #{tpu_custom_call.1} parent=1 // pred_fallthru
      _
    // Predicated region
    $region10: #{tpu_custom_call.1} parent=1 // pred_check
      _
    $region11: #{tpu_custom_call.1} parent=1 // pred_check_branch
      %38 = sbr.rel (0) target = $region13
    $region12: #{tpu_custom_call.1} parent=1 // pred_region
      %s40 = ssub.s32 512, 512
      %41 = vsyncadd [#allocation6], %s40
      %s42 = sshll.u32 [#allocation7], 4
      %s43 = int_to_ptr.vmem [resolvable:$true] %s42
      %48 = dma.hbm_to_vmem [thread:$0]  %s2, 512, %s43, [#allocation6], 128, 128, 8
    $region13: #{tpu_custom_call.1} parent=1 // pred_fallthru
      _
    // Predicated region
    $region14: #{tpu_custom_call.1} parent=1 // pred_check
      _
    $region15: #{tpu_custom_call.1} parent=1 // pred_check_branch
      %50 = sbr.rel (0) target = $region17
    $region16: #{tpu_custom_call.1} parent=1 // pred_region
      _
    $region17: #{tpu_custom_call.1} parent=1 // pred_fallthru
      _
    // Predicated region
    $region18: #{tpu_custom_call.1} parent=1 // pred_check
      _
    $region19: #{tpu_custom_call.1} parent=1 // pred_check_branch
      %52 = sbr.rel (0) target = $region21
    $region20: #{tpu_custom_call.1} parent=1 // pred_region
      %53 = dma.done [#allocation3], 512
    $region21: #{tpu_custom_call.1} parent=1 // pred_fallthru
      _
    // Predicated region
    $region22: #{tpu_custom_call.1} parent=1 // pred_check
      _
    $region23: #{tpu_custom_call.1} parent=1 // pred_check_branch
      %55 = sbr.rel (0) target = $region25
    $region24: #{tpu_custom_call.1} parent=1 // pred_region
      %56 = dma.done [#allocation6], 64
    $region25: #{tpu_custom_call.1} parent=1 // pred_fallthru
      _
    // Predicated region
    $region26: #{tpu_custom_call.1} parent=1 // pred_check
      _
    $region27: #{tpu_custom_call.1} parent=1 // pred_check_branch
      %58 = sbr.rel (0) target = $region29
    $region28: #{tpu_custom_call.1} parent=1 // pred_region
      %59 = dma.done [#allocation6], 512
    $region29: #{tpu_custom_call.1} parent=1 // pred_fallthru
      _
    %v60 = vld [vmem:[#allocation7] sm:$0xff]
    %v61 = vld [vmem:[#allocation7 + $0x8] sm:$0xff]
    %v62 = vld [vmem:[#allocation7 + $0x10] sm:$0xff]
    %v63 = vld [vmem:[#allocation7 + $0x18] sm:$0xff]
    %v64 = vld [vmem:[%s3] sm:$0x1]
    %v65 = vld [vmem:[#allocation5] sm:$0xf]
    %v66 = vld [vmem:[#allocation2] sm:$0xf]
    %v68 = vlaneseq
    %v69 = vshrl.u32 %v68, 7
    %v70 = vsub.s32 0, %v69
    %v71 = vrot.slane %v64, %v70
    %vm73 = vcmask 261120
    %v75 = vsel %vm73, %v65, 0
    %77 = vmatprep.subr.mxu0 0.0
    %78 = vmatpush1.msra.mxu0 %v60
    %79 = vmatprep.subr.mxu0 0.0
    %80 = vmatpush1.msra.mxu0 %v61
    %81 = vmatprep.subr.mxu0 0.0
    %82 = vmatpush1.msra.mxu0 %v62
    %83 = vmatprep.subr.mxu0 0.0
    %84 = vmatpush1.msra.mxu0 %v63
    %85 = vmatprep.subr.mxu0 0.0
    %86 = vmatpush1.msra.mxu0 0.0
    %87 = vmatprep.subr.mxu0 0.0
    %88 = vmatpush1.msra.mxu0 0.0
    %89 = vmatprep.subr.mxu0 0.0
    %90 = vmatpush1.msra.mxu0 0.0
    %91 = vmatprep.subr.mxu0 0.0
    %92 = vmatpush1.msra.mxu0 0.0
    %93 = vmatprep.subr.mxu0 0.0
    %94 = vmatpush1.msra.mxu0 0.0
    %95 = vmatprep.subr.mxu0 0.0
    %96 = vmatpush1.msra.mxu0 0.0
    %97 = vmatprep.subr.mxu0 0.0
    %98 = vmatpush1.msra.mxu0 0.0
    %99 = vmatprep.subr.mxu0 0.0
    %100 = vmatpush1.msra.mxu0 0.0
    %101 = vmatprep.subr.mxu0 0.0
    %102 = vmatpush1.msra.mxu0 0.0
    %103 = vmatprep.subr.mxu0 0.0
    %104 = vmatpush1.msra.mxu0 0.0
    %105 = vmatprep.subr.mxu0 0.0
    %106 = vmatpush1.msra.mxu0 0.0
    %107 = vmatprep.subr.mxu0 0.0
    %108 = vmatpush1.msra.mxu0 0.0
    %109 = vmatprep.subr.mxu0 0.0
    %110 = vmatpush1.msra.mxu0 0.0
    %111 = vmatprep.subr.mxu0 0.0
    %112 = vmatpush1.msra.mxu0 0.0
    %113 = vmatprep.subr.mxu0 0.0
    %114 = vmatpush1.msra.mxu0 0.0
    %115 = vmatprep.subr.mxu0 0.0
    %116 = vmatpush1.msra.mxu0 0.0
    %117 = vmatprep.subr.mxu0 0.0
    %118 = vmatpush1.msra.mxu0 0.0
    %119 = vmatprep.subr.mxu0 0.0
    %120 = vmatpush1.msra.mxu0 0.0
    %121 = vmatprep.subr.mxu0 0.0
    %122 = vmatpush1.msra.mxu0 0.0
    %123 = vmatprep.subr.mxu0 0.0
    %124 = vmatpush1.msra.mxu0 0.0
    %125 = vmatprep.subr.mxu0 0.0
    %126 = vmatpush1.msra.mxu0 0.0
    %127 = vmatprep.subr.mxu0 0.0
    %128 = vmatpush1.msra.mxu0 0.0
    %129 = vmatprep.subr.mxu0 0.0
    %130 = vmatpush1.msra.mxu0 0.0
    %131 = vmatprep.subr.mxu0 0.0
    %132 = vmatpush1.msra.mxu0 0.0
    %133 = vmatprep.subr.mxu0 0.0
    %134 = vmatpush1.msra.mxu0 0.0
    %135 = vmatprep.subr.mxu0 0.0
    %136 = vmatpush1.msra.mxu0 0.0
    %137 = vmatprep.subr.mxu0 0.0
    %138 = vmatpush1.msra.mxu0 0.0
    %139 = vmatprep.subr.mxu0 0.0
    %140 = vmatpush1.msra.mxu0 0.0
    %141 = vmatprep.mubr.f32.mxu0 0.0
    %142 = vmatmul.mubr.f32.gmra.mrb[0].mxu0 %v75
    %v143 = vpop.f32.mrb[0].mxu0
    %v144 = vadd.f32 %v71, %v143
    %v145 = vpop.f32.mrb[0].mxu0
    %146 = vdwg.mxu0
    %v147 = vadd.f32 %v66, %v144
    %v148 = vxor.u32 %v147, 2147483648
    %v149 = vmul.f32 %v148, 1.442695
    %v150 = vpow.pop %v149
    %v151 = vadd.f32 %v150, 1.0
    %v152 = vrcp.pop %v151
    %v153 = vmul.f32 1.0, %v152
    %155 = vrot.lane.b32.xlu0 %v144, 64
    %v156 = vpop.permute.xlu0 %155
    %v158 = vmul.f32 %v153, %v156
    %160 = vrot.lane.b32.xlu0 %v158, 64
    %v161 = vpop.permute.xlu0 %160
    %v163 = vadd.f32 %v66, %v161
    %v164 = vtanh.pop %v163
    %v165 = vsub.f32 1.0, %v153
    %167 = vrot.lane.b32.xlu0 %v164, 96
    %v168 = vpop.permute.xlu0 %167
    %v170 = vmul.f32 %v165, %v168
    %171 = vrot.lane.b32.xlu0 %v65, 32
    %v172 = vpop.permute.xlu0 %171
    %v174 = vmul.f32 %v153, %v172
    %v175 = vadd.f32 %v170, %v174
    %v176 = vmax.f32 %v175, 0.0
    %178 = vrot.lane.b32.xlu0 %v176, 96
    %v179 = vpop.permute.xlu0 %178
    %vm181 = vcmask 257024
    %182 = vst.msk [vmem:[#allocation8] sm:$0xf] %vm181, %v179
    %s183 = scalar_lea.vmem [#allocation2], 4
    %v184 = vld [vmem:[%s183] sm:$0xf]
    %186 = vrot.lane.b32.xlu0 %v175, 96
    %v187 = vpop.permute.xlu0 %186
    %v188 = vsel %vm73, %v187, 0
    %190 = vmatprep.subr.mxu0 0.0
    %191 = vmatpush1.msra.mxu0 %v60
    %192 = vmatprep.subr.mxu0 0.0
    %193 = vmatpush1.msra.mxu0 %v61
    %194 = vmatprep.subr.mxu0 0.0
    %195 = vmatpush1.msra.mxu0 %v62
    %196 = vmatprep.subr.mxu0 0.0
    %197 = vmatpush1.msra.mxu0 %v63
    %198 = vmatprep.subr.mxu0 0.0
    %199 = vmatpush1.msra.mxu0 0.0
    %200 = vmatprep.subr.mxu0 0.0
    %201 = vmatpush1.msra.mxu0 0.0
    %202 = vmatprep.subr.mxu0 0.0
    %203 = vmatpush1.msra.mxu0 0.0
    %204 = vmatprep.subr.mxu0 0.0
    %205 = vmatpush1.msra.mxu0 0.0
    %206 = vmatprep.subr.mxu0 0.0
    %207 = vmatpush1.msra.mxu0 0.0
    %208 = vmatprep.subr.mxu0 0.0
    %209 = vmatpush1.msra.mxu0 0.0
    %210 = vmatprep.subr.mxu0 0.0
    %211 = vmatpush1.msra.mxu0 0.0
    %212 = vmatprep.subr.mxu0 0.0
    %213 = vmatpush1.msra.mxu0 0.0
    %214 = vmatprep.subr.mxu0 0.0
    %215 = vmatpush1.msra.mxu0 0.0
    %216 = vmatprep.subr.mxu0 0.0
    %217 = vmatpush1.msra.mxu0 0.0
    %218 = vmatprep.subr.mxu0 0.0
    %219 = vmatpush1.msra.mxu0 0.0
    %220 = vmatprep.subr.mxu0 0.0
    %221 = vmatpush1.msra.mxu0 0.0
    %222 = vmatprep.subr.mxu0 0.0
    %223 = vmatpush1.msra.mxu0 0.0
    %224 = vmatprep.subr.mxu0 0.0
    %225 = vmatpush1.msra.mxu0 0.0
    %226 = vmatprep.subr.mxu0 0.0
    %227 = vmatpush1.msra.mxu0 0.0
    %228 = vmatprep.subr.mxu0 0.0
    %229 = vmatpush1.msra.mxu0 0.0
    %230 = vmatprep.subr.mxu0 0.0
    %231 = vmatpush1.msra.mxu0 0.0
    %232 = vmatprep.subr.mxu0 0.0
    %233 = vmatpush1.msra.mxu0 0.0
    %234 = vmatprep.subr.mxu0 0.0
    %235 = vmatpush1.msra.mxu0 0.0
    %236 = vmatprep.subr.mxu0 0.0
    %237 = vmatpush1.msra.mxu0 0.0
    %238 = vmatprep.subr.mxu0 0.0
    %239 = vmatpush1.msra.mxu0 0.0
    %240 = vmatprep.subr.mxu0 0.0
    %241 = vmatpush1.msra.mxu0 0.0
    %242 = vmatprep.subr.mxu0 0.0
    %243 = vmatpush1.msra.mxu0 0.0
    %244 = vmatprep.subr.mxu0 0.0
    %245 = vmatpush1.msra.mxu0 0.0
    %246 = vmatprep.subr.mxu0 0.0
    %247 = vmatpush1.msra.mxu0 0.0
    %248 = vmatprep.subr.mxu0 0.0
    %249 = vmatpush1.msra.mxu0 0.0
    %250 = vmatprep.subr.mxu0 0.0
    %251 = vmatpush1.msra.mxu0 0.0
    %252 = vmatprep.subr.mxu0 0.0
    %253 = vmatpush1.msra.mxu0 0.0
    %254 = vmatprep.mubr.f32.mxu0 0.0
    %255 = vmatmul.mubr.f32.gmra.mrb[0].mxu0 %v188
    %v256 = vpop.f32.mrb[0].mxu0
    %v257 = vadd.f32 %v71, %v256
    %v258 = vpop.f32.mrb[0].mxu0
    %259 = vdwg.mxu0
    %v260 = vadd.f32 %v184, %v257
    %v261 = vxor.u32 %v260, 2147483648
    %v262 = vmul.f32 %v261, 1.442695
    %v263 = vpow.pop %v262
    %v264 = vadd.f32 %v263, 1.0
    %v265 = vrcp.pop %v264
    %v266 = vmul.f32 1.0, %v265
    %268 = vrot.lane.b32.xlu0 %v257, 64
    %v269 = vpop.permute.xlu0 %268
    %v271 = vmul.f32 %v266, %v269
    %273 = vrot.lane.b32.xlu0 %v271, 64
    %v274 = vpop.permute.xlu0 %273
    %v276 = vadd.f32 %v184, %v274
    %v277 = vtanh.pop %v276
    %v278 = vsub.f32 1.0, %v266
    %280 = vrot.lane.b32.xlu0 %v277, 96
    %v281 = vpop.permute.xlu0 %280
    %v283 = vmul.f32 %v278, %v281
    %v284 = vmul.f32 %v266, %v175
    %v285 = vadd.f32 %v283, %v284
    %v286 = vmax.f32 %v285, 0.0
    %288 = vrot.lane.b32.xlu0 %v286, 96
    %v289 = vpop.permute.xlu0 %288
    %s291 = scalar_lea.vmem [#allocation8], 4
    %292 = vst.msk [vmem:[%s291] sm:$0xf] %vm181, %v289
    %s293 = scalar_lea.vmem [#allocation2], 8
    %v294 = vld [vmem:[%s293] sm:$0xf]
    %296 = vrot.lane.b32.xlu0 %v285, 96
    %v297 = vpop.permute.xlu0 %296
    %v298 = vsel %vm73, %v297, 0
    %300 = vmatprep.subr.mxu0 0.0
    %301 = vmatpush1.msra.mxu0 %v60
    %302 = vmatprep.subr.mxu0 0.0
    %303 = vmatpush1.msra.mxu0 %v61
    %304 = vmatprep.subr.mxu0 0.0
    %305 = vmatpush1.msra.mxu0 %v62
    %306 = vmatprep.subr.mxu0 0.0
    %307 = vmatpush1.msra.mxu0 %v63
    %308 = vmatprep.subr.mxu0 0.0
    %309 = vmatpush1.msra.mxu0 0.0
    %310 = vmatprep.subr.mxu0 0.0
    %311 = vmatpush1.msra.mxu0 0.0
    %312 = vmatprep.subr.mxu0 0.0
    %313 = vmatpush1.msra.mxu0 0.0
    %314 = vmatprep.subr.mxu0 0.0
    %315 = vmatpush1.msra.mxu0 0.0
    %316 = vmatprep.subr.mxu0 0.0
    %317 = vmatpush1.msra.mxu0 0.0
    %318 = vmatprep.subr.mxu0 0.0
    %319 = vmatpush1.msra.mxu0 0.0
    %320 = vmatprep.subr.mxu0 0.0
    %321 = vmatpush1.msra.mxu0 0.0
    %322 = vmatprep.subr.mxu0 0.0
    %323 = vmatpush1.msra.mxu0 0.0
    %324 = vmatprep.subr.mxu0 0.0
    %325 = vmatpush1.msra.mxu0 0.0
    %326 = vmatprep.subr.mxu0 0.0
    %327 = vmatpush1.msra.mxu0 0.0
    %328 = vmatprep.subr.mxu0 0.0
    %329 = vmatpush1.msra.mxu0 0.0
    %330 = vmatprep.subr.mxu0 0.0
    %331 = vmatpush1.msra.mxu0 0.0
    %332 = vmatprep.subr.mxu0 0.0
    %333 = vmatpush1.msra.mxu0 0.0
    %334 = vmatprep.subr.mxu0 0.0
    %335 = vmatpush1.msra.mxu0 0.0
    %336 = vmatprep.subr.mxu0 0.0
    %337 = vmatpush1.msra.mxu0 0.0
    %338 = vmatprep.subr.mxu0 0.0
    %339 = vmatpush1.msra.mxu0 0.0
    %340 = vmatprep.subr.mxu0 0.0
    %341 = vmatpush1.msra.mxu0 0.0
    %342 = vmatprep.subr.mxu0 0.0
    %343 = vmatpush1.msra.mxu0 0.0
    %344 = vmatprep.subr.mxu0 0.0
    %345 = vmatpush1.msra.mxu0 0.0
    %346 = vmatprep.subr.mxu0 0.0
    %347 = vmatpush1.msra.mxu0 0.0
    %348 = vmatprep.subr.mxu0 0.0
    %349 = vmatpush1.msra.mxu0 0.0
    %350 = vmatprep.subr.mxu0 0.0
    %351 = vmatpush1.msra.mxu0 0.0
    %352 = vmatprep.subr.mxu0 0.0
    %353 = vmatpush1.msra.mxu0 0.0
    %354 = vmatprep.subr.mxu0 0.0
    %355 = vmatpush1.msra.mxu0 0.0
    %356 = vmatprep.subr.mxu0 0.0
    %357 = vmatpush1.msra.mxu0 0.0
    %358 = vmatprep.subr.mxu0 0.0
    %359 = vmatpush1.msra.mxu0 0.0
    %360 = vmatprep.subr.mxu0 0.0
    %361 = vmatpush1.msra.mxu0 0.0
    %362 = vmatprep.subr.mxu0 0.0
    %363 = vmatpush1.msra.mxu0 0.0
    %364 = vmatprep.mubr.f32.mxu0 0.0
    %365 = vmatmul.mubr.f32.gmra.mrb[0].mxu0 %v298
    %v366 = vpop.f32.mrb[0].mxu0
    %v367 = vadd.f32 %v71, %v366
    %v368 = vpop.f32.mrb[0].mxu0
    %369 = vdwg.mxu0
    %v370 = vadd.f32 %v294, %v367
    %v371 = vxor.u32 %v370, 2147483648
    %v372 = vmul.f32 %v371, 1.442695
    %v373 = vpow.pop %v372
    %v374 = vadd.f32 %v373, 1.0
    %v375 = vrcp.pop %v374
    %v376 = vmul.f32 1.0, %v375
    %378 = vrot.lane.b32.xlu0 %v367, 64
    %v379 = vpop.permute.xlu0 %378
    %v381 = vmul.f32 %v376, %v379
    %383 = vrot.lane.b32.xlu0 %v381, 64
    %v384 = vpop.permute.xlu0 %383
    %v386 = vadd.f32 %v294, %v384
    %v387 = vtanh.pop %v386
    %v388 = vsub.f32 1.0, %v376
    %390 = vrot.lane.b32.xlu0 %v387, 96
    %v391 = vpop.permute.xlu0 %390
    %v393 = vmul.f32 %v388, %v391
    %v394 = vmul.f32 %v376, %v285
    %v395 = vadd.f32 %v393, %v394
    %v396 = vmax.f32 %v395, 0.0
    %398 = vrot.lane.b32.xlu0 %v396, 96
    %v399 = vpop.permute.xlu0 %398
    %s401 = scalar_lea.vmem [#allocation8], 8
    %402 = vst.msk [vmem:[%s401] sm:$0xf] %vm181, %v399
    %s403 = scalar_lea.vmem [#allocation2], 12
    %v404 = vld [vmem:[%s403] sm:$0xf]
    %406 = vrot.lane.b32.xlu0 %v395, 96
    %v407 = vpop.permute.xlu0 %406
    %v408 = vsel %vm73, %v407, 0
    %410 = vmatprep.subr.mxu0 0.0
    %411 = vmatpush1.msra.mxu0 %v60
    %412 = vmatprep.subr.mxu0 0.0
    %413 = vmatpush1.msra.mxu0 %v61
    %414 = vmatprep.subr.mxu0 0.0
    %415 = vmatpush1.msra.mxu0 %v62
    %416 = vmatprep.subr.mxu0 0.0
    %417 = vmatpush1.msra.mxu0 %v63
    %418 = vmatprep.subr.mxu0 0.0
    %419 = vmatpush1.msra.mxu0 0.0
    %420 = vmatprep.subr.mxu0 0.0
    %421 = vmatpush1.msra.mxu0 0.0
    %422 = vmatprep.subr.mxu0 0.0
    %423 = vmatpush1.msra.mxu0 0.0
    %424 = vmatprep.subr.mxu0 0.0
    %425 = vmatpush1.msra.mxu0 0.0
    %426 = vmatprep.subr.mxu0 0.0
    %427 = vmatpush1.msra.mxu0 0.0
    %428 = vmatprep.subr.mxu0 0.0
    %429 = vmatpush1.msra.mxu0 0.0
    %430 = vmatprep.subr.mxu0 0.0
    %431 = vmatpush1.msra.mxu0 0.0
    %432 = vmatprep.subr.mxu0 0.0
    %433 = vmatpush1.msra.mxu0 0.0
    %434 = vmatprep.subr.mxu0 0.0
    %435 = vmatpush1.msra.mxu0 0.0
    %436 = vmatprep.subr.mxu0 0.0
    %437 = vmatpush1.msra.mxu0 0.0
    %438 = vmatprep.subr.mxu0 0.0
    %439 = vmatpush1.msra.mxu0 0.0
    %440 = vmatprep.subr.mxu0 0.0
    %441 = vmatpush1.msra.mxu0 0.0
    %442 = vmatprep.subr.mxu0 0.0
    %443 = vmatpush1.msra.mxu0 0.0
    %444 = vmatprep.subr.mxu0 0.0
    %445 = vmatpush1.msra.mxu0 0.0
    %446 = vmatprep.subr.mxu0 0.0
    %447 = vmatpush1.msra.mxu0 0.0
    %448 = vmatprep.subr.mxu0 0.0
    %449 = vmatpush1.msra.mxu0 0.0
    %450 = vmatprep.subr.mxu0 0.0
    %451 = vmatpush1.msra.mxu0 0.0
    %452 = vmatprep.subr.mxu0 0.0
    %453 = vmatpush1.msra.mxu0 0.0
    %454 = vmatprep.subr.mxu0 0.0
    %455 = vmatpush1.msra.mxu0 0.0
    %456 = vmatprep.subr.mxu0 0.0
    %457 = vmatpush1.msra.mxu0 0.0
    %458 = vmatprep.subr.mxu0 0.0
    %459 = vmatpush1.msra.mxu0 0.0
    %460 = vmatprep.subr.mxu0 0.0
    %461 = vmatpush1.msra.mxu0 0.0
    %462 = vmatprep.subr.mxu0 0.0
    %463 = vmatpush1.msra.mxu0 0.0
    %464 = vmatprep.subr.mxu0 0.0
    %465 = vmatpush1.msra.mxu0 0.0
    %466 = vmatprep.subr.mxu0 0.0
    %467 = vmatpush1.msra.mxu0 0.0
    %468 = vmatprep.subr.mxu0 0.0
    %469 = vmatpush1.msra.mxu0 0.0
    %470 = vmatprep.subr.mxu0 0.0
    %471 = vmatpush1.msra.mxu0 0.0
    %472 = vmatprep.subr.mxu0 0.0
    %473 = vmatpush1.msra.mxu0 0.0
    %474 = vmatprep.mubr.f32.mxu0 0.0
    %475 = vmatmul.mubr.f32.gmra.mrb[0].mxu0 %v408
    %v476 = vpop.f32.mrb[0].mxu0
    %v477 = vadd.f32 %v71, %v476
    %v478 = vpop.f32.mrb[0].mxu0
    %479 = vdwg.mxu0
    %v480 = vadd.f32 %v404, %v477
    %v481 = vxor.u32 %v480, 2147483648
    %v482 = vmul.f32 %v481, 1.442695
    %v483 = vpow.pop %v482
    %v484 = vadd.f32 %v483, 1.0
    %v485 = vrcp.pop %v484
    %v486 = vmul.f32 1.0, %v485
    %488 = vrot.lane.b32.xlu0 %v477, 64
    %v489 = vpop.permute.xlu0 %488
    %v491 = vmul.f32 %v486, %v489
    %493 = vrot.lane.b32.xlu0 %v491, 64
    %v494 = vpop.permute.xlu0 %493
    %v496 = vadd.f32 %v404, %v494
    %v497 = vtanh.pop %v496
    %v498 = vsub.f32 1.0, %v486
    %500 = vrot.lane.b32.xlu0 %v497, 96
    %v501 = vpop.permute.xlu0 %500
    %v503 = vmul.f32 %v498, %v501
    %v504 = vmul.f32 %v486, %v395
    %v505 = vadd.f32 %v503, %v504
    %v506 = vmax.f32 %v505, 0.0
    %508 = vrot.lane.b32.xlu0 %v506, 96
    %v509 = vpop.permute.xlu0 %508
    %s511 = scalar_lea.vmem [#allocation8], 12
    %512 = vst.msk [vmem:[%s511] sm:$0xf] %vm181, %v509
    %s513 = scalar_lea.vmem [#allocation2], 16
    %v514 = vld [vmem:[%s513] sm:$0xf]
    %516 = vrot.lane.b32.xlu0 %v505, 96
    %v517 = vpop.permute.xlu0 %516
    %v518 = vsel %vm73, %v517, 0
    %520 = vmatprep.subr.mxu0 0.0
    %521 = vmatpush1.msra.mxu0 %v60
    %522 = vmatprep.subr.mxu0 0.0
    %523 = vmatpush1.msra.mxu0 %v61
    %524 = vmatprep.subr.mxu0 0.0
    %525 = vmatpush1.msra.mxu0 %v62
    %526 = vmatprep.subr.mxu0 0.0
    %527 = vmatpush1.msra.mxu0 %v63
    %528 = vmatprep.subr.mxu0 0.0
    %529 = vmatpush1.msra.mxu0 0.0
    %530 = vmatprep.subr.mxu0 0.0
    %531 = vmatpush1.msra.mxu0 0.0
    %532 = vmatprep.subr.mxu0 0.0
    %533 = vmatpush1.msra.mxu0 0.0
    %534 = vmatprep.subr.mxu0 0.0
    %535 = vmatpush1.msra.mxu0 0.0
    %536 = vmatprep.subr.mxu0 0.0
    %537 = vmatpush1.msra.mxu0 0.0
    %538 = vmatprep.subr.mxu0 0.0
    %539 = vmatpush1.msra.mxu0 0.0
    %540 = vmatprep.subr.mxu0 0.0
    %541 = vmatpush1.msra.mxu0 0.0
    %542 = vmatprep.subr.mxu0 0.0
    %543 = vmatpush1.msra.mxu0 0.0
    %544 = vmatprep.subr.mxu0 0.0
    %545 = vmatpush1.msra.mxu0 0.0
    %546 = vmatprep.subr.mxu0 0.0
    %547 = vmatpush1.msra.mxu0 0.0
    %548 = vmatprep.subr.mxu0 0.0
    %549 = vmatpush1.msra.mxu0 0.0
    %550 = vmatprep.subr.mxu0 0.0
    %551 = vmatpush1.msra.mxu0 0.0
    %552 = vmatprep.subr.mxu0 0.0
    %553 = vmatpush1.msra.mxu0 0.0
    %554 = vmatprep.subr.mxu0 0.0
    %555 = vmatpush1.msra.mxu0 0.0
    %556 = vmatprep.subr.mxu0 0.0
    %557 = vmatpush1.msra.mxu0 0.0
    %558 = vmatprep.subr.mxu0 0.0
    %559 = vmatpush1.msra.mxu0 0.0
    %560 = vmatprep.subr.mxu0 0.0
    %561 = vmatpush1.msra.mxu0 0.0
    %562 = vmatprep.subr.mxu0 0.0
    %563 = vmatpush1.msra.mxu0 0.0
    %564 = vmatprep.subr.mxu0 0.0
    %565 = vmatpush1.msra.mxu0 0.0
    %566 = vmatprep.subr.mxu0 0.0
    %567 = vmatpush1.msra.mxu0 0.0
    %568 = vmatprep.subr.mxu0 0.0
    %569 = vmatpush1.msra.mxu0 0.0
    %570 = vmatprep.subr.mxu0 0.0
    %571 = vmatpush1.msra.mxu0 0.0
    %572 = vmatprep.subr.mxu0 0.0
    %573 = vmatpush1.msra.mxu0 0.0
    %574 = vmatprep.subr.mxu0 0.0
    %575 = vmatpush1.msra.mxu0 0.0
    %576 = vmatprep.subr.mxu0 0.0
    %577 = vmatpush1.msra.mxu0 0.0
    %578 = vmatprep.subr.mxu0 0.0
    %579 = vmatpush1.msra.mxu0 0.0
    %580 = vmatprep.subr.mxu0 0.0
    %581 = vmatpush1.msra.mxu0 0.0
    %582 = vmatprep.subr.mxu0 0.0
    %583 = vmatpush1.msra.mxu0 0.0
    %584 = vmatprep.mubr.f32.mxu0 0.0
    %585 = vmatmul.mubr.f32.gmra.mrb[0].mxu0 %v518
    %v586 = vpop.f32.mrb[0].mxu0
    %v587 = vadd.f32 %v71, %v586
    %v588 = vpop.f32.mrb[0].mxu0
    %589 = vdwg.mxu0
    %v590 = vadd.f32 %v514, %v587
    %v591 = vxor.u32 %v590, 2147483648
    %v592 = vmul.f32 %v591, 1.442695
    %v593 = vpow.pop %v592
    %v594 = vadd.f32 %v593, 1.0
    %v595 = vrcp.pop %v594
    %v596 = vmul.f32 1.0, %v595
    %598 = vrot.lane.b32.xlu0 %v587, 64
    %v599 = vpop.permute.xlu0 %598
    %v601 = vmul.f32 %v596, %v599
    %603 = vrot.lane.b32.xlu0 %v601, 64
    %v604 = vpop.permute.xlu0 %603
    %v606 = vadd.f32 %v514, %v604
    %v607 = vtanh.pop %v606
    %v608 = vsub.f32 1.0, %v596
    %610 = vrot.lane.b32.xlu0 %v607, 96
    %v611 = vpop.permute.xlu0 %610
    %v613 = vmul.f32 %v608, %v611
    %v614 = vmul.f32 %v596, %v505
    %v615 = vadd.f32 %v613, %v614
    %v616 = vmax.f32 %v615, 0.0
    %618 = vrot.lane.b32.xlu0 %v616, 96
    %v619 = vpop.permute.xlu0 %618
    %s621 = scalar_lea.vmem [#allocation8], 16
    %622 = vst.msk [vmem:[%s621] sm:$0xf] %vm181, %v619
    %s623 = scalar_lea.vmem [#allocation2], 20
    %v624 = vld [vmem:[%s623] sm:$0xf]
    %626 = vrot.lane.b32.xlu0 %v615, 96
    %v627 = vpop.permute.xlu0 %626
    %v628 = vsel %vm73, %v627, 0
    %630 = vmatprep.subr.mxu0 0.0
    %631 = vmatpush1.msra.mxu0 %v60
    %632 = vmatprep.subr.mxu0 0.0
    %633 = vmatpush1.msra.mxu0 %v61
    %634 = vmatprep.subr.mxu0 0.0
    %635 = vmatpush1.msra.mxu0 %v62
    %636 = vmatprep.subr.mxu0 0.0
    %637 = vmatpush1.msra.mxu0 %v63
    %638 = vmatprep.subr.mxu0 0.0
    %639 = vmatpush1.msra.mxu0 0.0
    %640 = vmatprep.subr.mxu0 0.0
    %641 = vmatpush1.msra.mxu0 0.0
    %642 = vmatprep.subr.mxu0 0.0
    %643 = vmatpush1.msra.mxu0 0.0
    %644 = vmatprep.subr.mxu0 0.0
    %645 = vmatpush1.msra.mxu0 0.0
    %646 = vmatprep.subr.mxu0 0.0
    %647 = vmatpush1.msra.mxu0 0.0
    %648 = vmatprep.subr.mxu0 0.0
    %649 = vmatpush1.msra.mxu0 0.0
    %650 = vmatprep.subr.mxu0 0.0
    %651 = vmatpush1.msra.mxu0 0.0
    %652 = vmatprep.subr.mxu0 0.0
    %653 = vmatpush1.msra.mxu0 0.0
    %654 = vmatprep.subr.mxu0 0.0
    %655 = vmatpush1.msra.mxu0 0.0
    %656 = vmatprep.subr.mxu0 0.0
    %657 = vmatpush1.msra.mxu0 0.0
    %658 = vmatprep.subr.mxu0 0.0
    %659 = vmatpush1.msra.mxu0 0.0
    %660 = vmatprep.subr.mxu0 0.0
    %661 = vmatpush1.msra.mxu0 0.0
    %662 = vmatprep.subr.mxu0 0.0
    %663 = vmatpush1.msra.mxu0 0.0
    %664 = vmatprep.subr.mxu0 0.0
    %665 = vmatpush1.msra.mxu0 0.0
    %666 = vmatprep.subr.mxu0 0.0
    %667 = vmatpush1.msra.mxu0 0.0
    %668 = vmatprep.subr.mxu0 0.0
    %669 = vmatpush1.msra.mxu0 0.0
    %670 = vmatprep.subr.mxu0 0.0
    %671 = vmatpush1.msra.mxu0 0.0
    %672 = vmatprep.subr.mxu0 0.0
    %673 = vmatpush1.msra.mxu0 0.0
    %674 = vmatprep.subr.mxu0 0.0
    %675 = vmatpush1.msra.mxu0 0.0
    %676 = vmatprep.subr.mxu0 0.0
    %677 = vmatpush1.msra.mxu0 0.0
    %678 = vmatprep.subr.mxu0 0.0
    %679 = vmatpush1.msra.mxu0 0.0
    %680 = vmatprep.subr.mxu0 0.0
    %681 = vmatpush1.msra.mxu0 0.0
    %682 = vmatprep.subr.mxu0 0.0
    %683 = vmatpush1.msra.mxu0 0.0
    %684 = vmatprep.subr.mxu0 0.0
    %685 = vmatpush1.msra.mxu0 0.0
    %686 = vmatprep.subr.mxu0 0.0
    %687 = vmatpush1.msra.mxu0 0.0
    %688 = vmatprep.subr.mxu0 0.0
    %689 = vmatpush1.msra.mxu0 0.0
    %690 = vmatprep.subr.mxu0 0.0
    %691 = vmatpush1.msra.mxu0 0.0
    %692 = vmatprep.subr.mxu0 0.0
    %693 = vmatpush1.msra.mxu0 0.0
    %694 = vmatprep.mubr.f32.mxu0 0.0
    %695 = vmatmul.mubr.f32.gmra.mrb[0].mxu0 %v628
    %v696 = vpop.f32.mrb[0].mxu0
    %v697 = vadd.f32 %v71, %v696
    %v698 = vpop.f32.mrb[0].mxu0
    %699 = vdwg.mxu0
    %v700 = vadd.f32 %v624, %v697
    %v701 = vxor.u32 %v700, 2147483648
    %v702 = vmul.f32 %v701, 1.442695
    %v703 = vpow.pop %v702
    %v704 = vadd.f32 %v703, 1.0
    %v705 = vrcp.pop %v704
    %v706 = vmul.f32 1.0, %v705
    %708 = vrot.lane.b32.xlu0 %v697, 64
    %v709 = vpop.permute.xlu0 %708
    %v711 = vmul.f32 %v706, %v709
    %713 = vrot.lane.b32.xlu0 %v711, 64
    %v714 = vpop.permute.xlu0 %713
    %v716 = vadd.f32 %v624, %v714
    %v717 = vtanh.pop %v716
    %v718 = vsub.f32 1.0, %v706
    %720 = vrot.lane.b32.xlu0 %v717, 96
    %v721 = vpop.permute.xlu0 %720
    %v723 = vmul.f32 %v718, %v721
    %v724 = vmul.f32 %v706, %v615
    %v725 = vadd.f32 %v723, %v724
    %v726 = vmax.f32 %v725, 0.0
    %728 = vrot.lane.b32.xlu0 %v726, 96
    %v729 = vpop.permute.xlu0 %728
    %s731 = scalar_lea.vmem [#allocation8], 20
    %732 = vst.msk [vmem:[%s731] sm:$0xf] %vm181, %v729
    %s733 = scalar_lea.vmem [#allocation2], 24
    %v734 = vld [vmem:[%s733] sm:$0xf]
    %736 = vrot.lane.b32.xlu0 %v725, 96
    %v737 = vpop.permute.xlu0 %736
    %v738 = vsel %vm73, %v737, 0
    %740 = vmatprep.subr.mxu0 0.0
    %741 = vmatpush1.msra.mxu0 %v60
    %742 = vmatprep.subr.mxu0 0.0
    %743 = vmatpush1.msra.mxu0 %v61
    %744 = vmatprep.subr.mxu0 0.0
    %745 = vmatpush1.msra.mxu0 %v62
    %746 = vmatprep.subr.mxu0 0.0
    %747 = vmatpush1.msra.mxu0 %v63
    %748 = vmatprep.subr.mxu0 0.0
    %749 = vmatpush1.msra.mxu0 0.0
    %750 = vmatprep.subr.mxu0 0.0
    %751 = vmatpush1.msra.mxu0 0.0
    %752 = vmatprep.subr.mxu0 0.0
    %753 = vmatpush1.msra.mxu0 0.0
    %754 = vmatprep.subr.mxu0 0.0
    %755 = vmatpush1.msra.mxu0 0.0
    %756 = vmatprep.subr.mxu0 0.0
    %757 = vmatpush1.msra.mxu0 0.0
    %758 = vmatprep.subr.mxu0 0.0
    %759 = vmatpush1.msra.mxu0 0.0
    %760 = vmatprep.subr.mxu0 0.0
    %761 = vmatpush1.msra.mxu0 0.0
    %762 = vmatprep.subr.mxu0 0.0
    %763 = vmatpush1.msra.mxu0 0.0
    %764 = vmatprep.subr.mxu0 0.0
    %765 = vmatpush1.msra.mxu0 0.0
    %766 = vmatprep.subr.mxu0 0.0
    %767 = vmatpush1.msra.mxu0 0.0
    %768 = vmatprep.subr.mxu0 0.0
    %769 = vmatpush1.msra.mxu0 0.0
    %770 = vmatprep.subr.mxu0 0.0
    %771 = vmatpush1.msra.mxu0 0.0
    %772 = vmatprep.subr.mxu0 0.0
    %773 = vmatpush1.msra.mxu0 0.0
    %774 = vmatprep.subr.mxu0 0.0
    %775 = vmatpush1.msra.mxu0 0.0
    %776 = vmatprep.subr.mxu0 0.0
    %777 = vmatpush1.msra.mxu0 0.0
    %778 = vmatprep.subr.mxu0 0.0
    %779 = vmatpush1.msra.mxu0 0.0
    %780 = vmatprep.subr.mxu0 0.0
    %781 = vmatpush1.msra.mxu0 0.0
    %782 = vmatprep.subr.mxu0 0.0
    %783 = vmatpush1.msra.mxu0 0.0
    %784 = vmatprep.subr.mxu0 0.0
    %785 = vmatpush1.msra.mxu0 0.0
    %786 = vmatprep.subr.mxu0 0.0
    %787 = vmatpush1.msra.mxu0 0.0
    %788 = vmatprep.subr.mxu0 0.0
    %789 = vmatpush1.msra.mxu0 0.0
    %790 = vmatprep.subr.mxu0 0.0
    %791 = vmatpush1.msra.mxu0 0.0
    %792 = vmatprep.subr.mxu0 0.0
    %793 = vmatpush1.msra.mxu0 0.0
    %794 = vmatprep.subr.mxu0 0.0
    %795 = vmatpush1.msra.mxu0 0.0
    %796 = vmatprep.subr.mxu0 0.0
    %797 = vmatpush1.msra.mxu0 0.0
    %798 = vmatprep.subr.mxu0 0.0
    %799 = vmatpush1.msra.mxu0 0.0
    %800 = vmatprep.subr.mxu0 0.0
    %801 = vmatpush1.msra.mxu0 0.0
    %802 = vmatprep.subr.mxu0 0.0
    %803 = vmatpush1.msra.mxu0 0.0
    %804 = vmatprep.mubr.f32.mxu0 0.0
    %805 = vmatmul.mubr.f32.gmra.mrb[0].mxu0 %v738
    %v806 = vpop.f32.mrb[0].mxu0
    %v807 = vadd.f32 %v71, %v806
    %v808 = vpop.f32.mrb[0].mxu0
    %809 = vdwg.mxu0
    %v810 = vadd.f32 %v734, %v807
    %v811 = vxor.u32 %v810, 2147483648
    %v812 = vmul.f32 %v811, 1.442695
    %v813 = vpow.pop %v812
    %v814 = vadd.f32 %v813, 1.0
    %v815 = vrcp.pop %v814
    %v816 = vmul.f32 1.0, %v815
    %818 = vrot.lane.b32.xlu0 %v807, 64
    %v819 = vpop.permute.xlu0 %818
    %v821 = vmul.f32 %v816, %v819
    %823 = vrot.lane.b32.xlu0 %v821, 64
    %v824 = vpop.permute.xlu0 %823
    %v826 = vadd.f32 %v734, %v824
    %v827 = vtanh.pop %v826
    %v828 = vsub.f32 1.0, %v816
    %830 = vrot.lane.b32.xlu0 %v827, 96
    %v831 = vpop.permute.xlu0 %830
    %v833 = vmul.f32 %v828, %v831
    %v834 = vmul.f32 %v816, %v725
    %v835 = vadd.f32 %v833, %v834
    %v836 = vmax.f32 %v835, 0.0
    %838 = vrot.lane.b32.xlu0 %v836, 96
    %v839 = vpop.permute.xlu0 %838
    %s841 = scalar_lea.vmem [#allocation8], 24
    %842 = vst.msk [vmem:[%s841] sm:$0xf] %vm181, %v839
    %s843 = scalar_lea.vmem [#allocation2], 28
    %v844 = vld [vmem:[%s843] sm:$0xf]
    %846 = vrot.lane.b32.xlu0 %v835, 96
    %v847 = vpop.permute.xlu0 %846
    %v848 = vsel %vm73, %v847, 0
    %850 = vmatprep.subr.mxu0 0.0
    %851 = vmatpush1.msra.mxu0 %v60
    %852 = vmatprep.subr.mxu0 0.0
    %853 = vmatpush1.msra.mxu0 %v61
    %854 = vmatprep.subr.mxu0 0.0
    %855 = vmatpush1.msra.mxu0 %v62
    %856 = vmatprep.subr.mxu0 0.0
    %857 = vmatpush1.msra.mxu0 %v63
    %858 = vmatprep.subr.mxu0 0.0
    %859 = vmatpush1.msra.mxu0 0.0
    %860 = vmatprep.subr.mxu0 0.0
    %861 = vmatpush1.msra.mxu0 0.0
    %862 = vmatprep.subr.mxu0 0.0
    %863 = vmatpush1.msra.mxu0 0.0
    %864 = vmatprep.subr.mxu0 0.0
    %865 = vmatpush1.msra.mxu0 0.0
    %866 = vmatprep.subr.mxu0 0.0
    %867 = vmatpush1.msra.mxu0 0.0
    %868 = vmatprep.subr.mxu0 0.0
    %869 = vmatpush1.msra.mxu0 0.0
    %870 = vmatprep.subr.mxu0 0.0
    %871 = vmatpush1.msra.mxu0 0.0
    %872 = vmatprep.subr.mxu0 0.0
    %873 = vmatpush1.msra.mxu0 0.0
    %874 = vmatprep.subr.mxu0 0.0
    %875 = vmatpush1.msra.mxu0 0.0
    %876 = vmatprep.subr.mxu0 0.0
    %877 = vmatpush1.msra.mxu0 0.0
    %878 = vmatprep.subr.mxu0 0.0
    %879 = vmatpush1.msra.mxu0 0.0
    %880 = vmatprep.subr.mxu0 0.0
    %881 = vmatpush1.msra.mxu0 0.0
    %882 = vmatprep.subr.mxu0 0.0
    %883 = vmatpush1.msra.mxu0 0.0
    %884 = vmatprep.subr.mxu0 0.0
    %885 = vmatpush1.msra.mxu0 0.0
    %886 = vmatprep.subr.mxu0 0.0
    %887 = vmatpush1.msra.mxu0 0.0
    %888 = vmatprep.subr.mxu0 0.0
    %889 = vmatpush1.msra.mxu0 0.0
    %890 = vmatprep.subr.mxu0 0.0
    %891 = vmatpush1.msra.mxu0 0.0
    %892 = vmatprep.subr.mxu0 0.0
    %893 = vmatpush1.msra.mxu0 0.0
    %894 = vmatprep.subr.mxu0 0.0
    %895 = vmatpush1.msra.mxu0 0.0
    %896 = vmatprep.subr.mxu0 0.0
    %897 = vmatpush1.msra.mxu0 0.0
    %898 = vmatprep.subr.mxu0 0.0
    %899 = vmatpush1.msra.mxu0 0.0
    %900 = vmatprep.subr.mxu0 0.0
    %901 = vmatpush1.msra.mxu0 0.0
    %902 = vmatprep.subr.mxu0 0.0
    %903 = vmatpush1.msra.mxu0 0.0
    %904 = vmatprep.subr.mxu0 0.0
    %905 = vmatpush1.msra.mxu0 0.0
    %906 = vmatprep.subr.mxu0 0.0
    %907 = vmatpush1.msra.mxu0 0.0
    %908 = vmatprep.subr.mxu0 0.0
    %909 = vmatpush1.msra.mxu0 0.0
    %910 = vmatprep.subr.mxu0 0.0
    %911 = vmatpush1.msra.mxu0 0.0
    %912 = vmatprep.subr.mxu0 0.0
    %913 = vmatpush1.msra.mxu0 0.0
    %914 = vmatprep.mubr.f32.mxu0 0.0
    %915 = vmatmul.mubr.f32.gmra.mrb[0].mxu0 %v848
    %v916 = vpop.f32.mrb[0].mxu0
    %v917 = vadd.f32 %v71, %v916
    %v918 = vpop.f32.mrb[0].mxu0
    %919 = vdwg.mxu0
    %v920 = vadd.f32 %v844, %v917
    %v921 = vxor.u32 %v920, 2147483648
    %v922 = vmul.f32 %v921, 1.442695
    %v923 = vpow.pop %v922
    %v924 = vadd.f32 %v923, 1.0
    %v925 = vrcp.pop %v924
    %v926 = vmul.f32 1.0, %v925
    %928 = vrot.lane.b32.xlu0 %v917, 64
    %v929 = vpop.permute.xlu0 %928
    %v931 = vmul.f32 %v926, %v929
    %933 = vrot.lane.b32.xlu0 %v931, 64
    %v934 = vpop.permute.xlu0 %933
    %v936 = vadd.f32 %v844, %v934
    %v937 = vtanh.pop %v936
    %v938 = vsub.f32 1.0, %v926
    %940 = vrot.lane.b32.xlu0 %v937, 96
    %v941 = vpop.permute.xlu0 %940
    %v943 = vmul.f32 %v938, %v941
    %v944 = vmul.f32 %v926, %v835
    %v945 = vadd.f32 %v943, %v944
    %v946 = vmax.f32 %v945, 0.0
    %948 = vrot.lane.b32.xlu0 %v946, 96
    %v949 = vpop.permute.xlu0 %948
    %s951 = scalar_lea.vmem [#allocation8], 28
    %952 = vst.msk [vmem:[%s951] sm:$0xf] %vm181, %v949
    %954 = vrot.lane.b32.xlu0 %v945, 96
    %v955 = vpop.permute.xlu0 %954
    %957 = vst.msk [vmem:[#allocation9] sm:$0xf] %vm181, %v955
    // Predicated region
    $region30: #{tpu_custom_call.1} parent=1 // pred_check
      _
    $region31: #{tpu_custom_call.1} parent=1 // pred_check_branch
      %959 = sbr.rel (0) target = $region33
    $region32: #{tpu_custom_call.1} parent=1 // pred_region
      %s961 = ssub.s32 512, 512
      %962 = vsyncadd [#allocation4], %s961
      %s963 = sshll.u32 [#allocation8], 4
      %s964 = int_to_ptr.vmem [resolvable:$true] %s963
      %969 = dma.vmem_to_hbm [thread:$0]  %s964, 512, %s4, [#allocation4], 64, 64, 4
    $region33: #{tpu_custom_call.1} parent=1 // pred_fallthru
      _
    // Predicated region
    $region34: #{tpu_custom_call.1} parent=1 // pred_check
      _
    $region35: #{tpu_custom_call.1} parent=1 // pred_check_branch
      %971 = sbr.rel (0) target = $region37
    $region36: #{tpu_custom_call.1} parent=1 // pred_region
      %s973 = ssub.s32 64, 64
      %974 = vsyncadd [#allocation10], %s973
      %s976 = sshll.u32 [#allocation9], 4
      %s977 = int_to_ptr.vmem [resolvable:$true] %s976
      %979 = dma.vmem_to_hbm [thread:$0]  %s977, 64, %s5, [#allocation10]
    $region37: #{tpu_custom_call.1} parent=1 // pred_fallthru
      _
    // Predicated region
    $region38: #{tpu_custom_call.1} parent=1 // pred_check
      _
    $region39: #{tpu_custom_call.1} parent=1 // pred_check_branch
      %981 = sbr.rel (0) target = $region41
    $region40: #{tpu_custom_call.1} parent=1 // pred_region
      %982 = dma.done [#allocation4], 512
    $region41: #{tpu_custom_call.1} parent=1 // pred_fallthru
      _
    // Predicated region
    $region42: #{tpu_custom_call.1} parent=1 // pred_check
      _
    $region43: #{tpu_custom_call.1} parent=1 // pred_check_branch
      %984 = sbr.rel (0) target = $region45
    $region44: #{tpu_custom_call.1} parent=1 // pred_region
      %985 = dma.done [#allocation10], 64
    $region45: #{tpu_custom_call.1} parent=1 // pred_fallthru
      _
    %986 = vsyncpa [#allocation3], 1
    %987 = vsyncpa [#allocation6], 1
    %988 = vsyncpa [#allocation4], 1
    %989 = vsyncpa [#allocation10], 1

</llo_original>
